<compile_context>
chip_gen: v5e
topology: v5e:2x2
jax: 0.10.0
libtpu: 0.0.40
codegen_flags: <defaults>
</compile_context>

<pallas_src>
import jax
import jax.numpy as jnp
from jax.experimental import pallas as pl
from jax.experimental.pallas import tpu as pltpu


def edge_decoder_kernel(x_ref, w1_ref, b1_ref, w2_ref, b2_ref,
                        w34t_ref, b34_ref, out_ref):
    # Weights arrive in the compute dtype (bf16); x arrives as f32 and is cast
    # here (saves the HBM round-trip of a pre-cast copy). MXU accumulates f32.
    w1 = w1_ref[...]
    x = x_ref[...].astype(w1.dtype)

    # lin1 -> ReLU   (dropout = identity at eval)
    z = jnp.dot(x, w1, preferred_element_type=jnp.float32) + b1_ref[...]
    z = jnp.maximum(z, 0.0)

    # lin2 -> ReLU   (dropout = identity at eval)
    w2 = w2_ref[...]
    z = jnp.dot(z.astype(w2.dtype), w2,
                preferred_element_type=jnp.float32) + b2_ref[...]
    z = jnp.maximum(z, 0.0)

    # lin3/lin4 folded: z @ (w3@w4) + (b3@w4 + b4), computed as
    # w34^T (1,H) contracted against z (TM,H) over H so the result is a
    # lane-dense (1, TM) row -> unmasked vector stores on full tiles.
    w34t = w34t_ref[...]                                       # (1, H)
    y = jax.lax.dot_general(
        w34t, z.astype(w34t.dtype),
        dimension_numbers=(((1,), (1,)), ((), ())),
        preferred_element_type=jnp.float32,
    ) + b34_ref[...]                                           # (1, TM)

    out_ref[...] = y.astype(out_ref.dtype)


def _round_up(n, m):
    return ((n + m - 1) // m) * m


def _cdiv(a, b):
    return -(-a // b)


def _vmem_capacity_bytes():
    # Per-generation VMEM: 128 MiB on v5e/v6e, 64 MiB on v7x. Fall back to the
    # smallest (v7x) if the query is unavailable.
    try:
        info = pltpu.get_tpu_info()
        return int(getattr(info, "vmem_capacity_bytes", 64 * 1024 * 1024))
    except Exception:
        return 64 * 1024 * 1024


def edge_decoder_forward(z_dict, edge_label_index, params, *,
                         target_tile_bytes=None, compute_dtype=jnp.bfloat16):
    """Mirror of EdgeDecoder.forward (eval mode).

    Returns (z2, x, edge_label_index) exactly like the PyTorch module:
      z2 : (E,)  flattened predictions
      x  : (E, 2*H) concatenated edge features
    """
    row, col = edge_label_index[0], edge_label_index[1]
    # Gather + concat (glue). x is a required module output, so it has to be
    # materialized to HBM regardless of where the gather runs.
    # TODO(synk): for very large E with small z_dict tables, fuse the gather
    # into the kernel (VMEM-resident tables + tiled int32 index block) to
    # drop the kernel's HBM read of x entirely.
    x = jnp.concatenate([z_dict["chem"][row], z_dict["protein"][col]],
                        axis=-1).astype(jnp.float32)

    E, F = x.shape              # F = 2 * hidden
    H = F // 2
    cdt = compute_dtype

    if E == 0:                  # degenerate path: avoid a zero-size grid
        return jnp.zeros((0,), jnp.float32), x, edge_label_index

    # Fold lin3 into lin4 (exact: no activation between them), f32 math.
    w34 = params["w3"] @ params["w4"]                                    # (H, 1)
    b34 = (params["b3"] @ params["w4"] + params["b4"]).astype(jnp.float32)  # (1,1)
    w34t = w34.T.astype(cdt)                                             # (1, H)

    w1 = params["w1"].astype(cdt)
    w2 = params["w2"].astype(cdt)
    b1 = params["b1"].astype(jnp.float32)
    b2 = params["b2"].astype(jnp.float32)

    # ---- tile selection (adaptive to F and the VMEM budget) -----------------
    vmem_cap = _vmem_capacity_bytes()
    x_itemsize = 4              # x streams in f32
    if target_tile_bytes is None:
        # ~4 MiB x tiles amortize the per-grid-step overhead; never ask for
        # more than a small fraction of the generation's VMEM (double-buffered).
        target_tile_bytes = min(4 * 1024 * 1024,
                                max(512 * 1024, vmem_cap // 16))
    tm = (int(target_tile_bytes) // (F * x_itemsize)) // 128 * 128
    tm = max(128, min(tm, 32768))
    tm = min(tm, _round_up(E, 128))          # no point exceeding the edge count

    n_tiles = _cdiv(E, tm)
    # Best-effort even tile count so the "parallel" axis splits across both
    # v7x TensorCores (harmless no-op on single-TC generations).
    if n_tiles > 1 and n_tiles % 2 == 1:
        tm_alt = _round_up(_cdiv(E, n_tiles + 1), 128)
        n_alt = _cdiv(E, tm_alt)
        if n_alt % 2 == 0:
            tm, n_tiles = tm_alt, n_alt

    # ---- VMEM limit derived from actual buffer footprint --------------------
    param_bytes = sum(int(a.size) * jnp.dtype(a.dtype).itemsize
                      for a in (w1, b1, w2, b2, w34t, b34))
    pipeline_bytes = (2 * tm * F * 4          # double-buffered f32 x tile
                      + 2 * tm * 4            # double-buffered (1, tm) f32 out
                      + 2 * param_bytes)      # resident (double-buffered) params
    scratch_headroom = 4 * tm * H * 4 + (4 << 20)   # (tm,H) intermediates + slack
    vmem_limit = max(32 << 20, pipeline_bytes + scratch_headroom)
    vmem_limit = min(vmem_limit, max(32 << 20, int(vmem_cap * 0.75)))

    cost = pl.CostEstimate(
        flops=2 * E * (F * H + H * H + H),
        transcendentals=0,
        bytes_accessed=int(E * F * x_itemsize + E * 4 + param_bytes),
    )

    const = lambda i: (0, 0)
    # NOTE: E need not be a multiple of tm — the last x/out block is partial.
    # Out-of-bounds x rows read unspecified values; since every row is
    # independent, the garbage only reaches output lanes whose stores are
    # dropped (beyond E), so results are exact.
    # TODO(synk): single-buffer the constant-index weight specs
    # (pipeline_mode=pl.Buffered(1)) once that path is needed for large H.
    out = pl.pallas_call(
        edge_decoder_kernel,
        out_shape=jax.ShapeDtypeStruct((1, E), jnp.float32),
        grid=(n_tiles,),
        in_specs=[
            pl.BlockSpec((tm, F), lambda i: (i, 0)),    # x: tiled over edges (f32)
            pl.BlockSpec((F, H), const),                # w1 (VMEM-resident)
            pl.BlockSpec((1, H), const),                # b1
            pl.BlockSpec((H, H), const),                # w2
            pl.BlockSpec((1, H), const),                # b2
            pl.BlockSpec((1, H), const),                # w34^T (folded lin3/lin4)
            pl.BlockSpec((1, 1), const),                # b34
        ],
        out_specs=pl.BlockSpec((1, tm), lambda i: (0, i)),   # lane-dense result row
        compiler_params=pltpu.CompilerParams(
            dimension_semantics=("parallel",),          # megacore sharding on v7x
            vmem_limit_bytes=int(vmem_limit),
        ),
        cost_estimate=cost,
    )(x, w1, b1, w2, b2, w34t, b34)

    z2 = out.reshape(-1)        # torch .view(-1)
    return z2, x, edge_label_index


def init_params(key, hidden_channels):
    """Deterministic synthetic parameters matching torch.nn.Linear shapes.

    PyTorch Linear(in, out) holds weight (out, in); we store the transpose
    (in, out) so the kernel does x @ W. Biases are (1, out) for broadcasting.
    """
    H = hidden_channels
    ks = jax.random.split(key, 8)

    def lin(kw, kb, fin, fout):
        bound = 1.0 / (fin ** 0.5)
        w = jax.random.uniform(kw, (fin, fout), jnp.float32, -bound, bound)
        b = jax.random.uniform(kb, (1, fout), jnp.float32, -bound, bound)
        return w, b

    w1, b1 = lin(ks[0], ks[1], 2 * H, H)
    w2, b2 = lin(ks[2], ks[3], H, H)
    w3, b3 = lin(ks[4], ks[5], H, H)
    w4, b4 = lin(ks[6], ks[7], H, 1)
    return {"w1": w1, "b1": b1, "w2": w2, "b2": b2,
            "w3": w3, "b3": b3, "w4": w4, "b4": b4}


# --- pure-JAX references ------------------------------------------------------

def _ref_mlp_f32(x, p):
    """Exact f32 math of the PyTorch module (unfused, dropout elided)."""
    z = jnp.maximum(x @ p["w1"] + p["b1"], 0.0)
    z = jnp.maximum(z @ p["w2"] + p["b2"], 0.0)
    z = z @ p["w3"] + p["b3"]
    z = z @ p["w4"] + p["b4"]
    return z.reshape(-1)


def _ref_mlp_kernel_math(x, p, cdt):
    """Same bf16-cast / f32-accumulate / lin3-lin4-folded math as the kernel."""
    f32 = jnp.float32
    z = jnp.dot(x.astype(cdt), p["w1"].astype(cdt),
                preferred_element_type=f32) + p["b1"]
    z = jnp.maximum(z, 0.0)
    z = jnp.dot(z.astype(cdt), p["w2"].astype(cdt),
                preferred_element_type=f32) + p["b2"]
    z = jnp.maximum(z, 0.0)
    w34 = p["w3"] @ p["w4"]
    b34 = p["b3"] @ p["w4"] + p["b4"]
    z = jnp.dot(z.astype(cdt), w34.astype(cdt),
                preferred_element_type=f32) + b34
    return z.reshape(-1)


if __name__ == "__main__":
    hidden = 32
    key = jax.random.PRNGKey(0)
    k_chem, k_prot, k_row, k_col, k_par, k_row2, k_col2 = jax.random.split(key, 7)

    n_chem, n_prot = 10, 12
    z_dict = {
        "chem": jax.random.normal(k_chem, (n_chem, hidden), jnp.float32),
        "protein": jax.random.normal(k_prot, (n_prot, hidden), jnp.float32),
    }
    params = init_params(k_par, hidden)

    # --- case 1: small edge set (single, partial tile) ------------------------
    n_edges = 16
    eli = jnp.stack([
        jax.random.randint(k_row, (n_edges,), 0, n_chem),
        jax.random.randint(k_col, (n_edges,), 0, n_prot),
    ])
    z2, x_cat, eli_out = edge_decoder_forward(z_dict, eli, params)
    jax.block_until_ready(z2)
    jax.block_until_ready(x_cat)

    assert z2.shape == (n_edges,)
    assert x_cat.shape == (n_edges, 2 * hidden)

    ref_exact = _ref_mlp_kernel_math(x_cat, params, jnp.bfloat16)
    assert jnp.allclose(z2, ref_exact, atol=2e-3, rtol=2e-3), \
        float(jnp.max(jnp.abs(z2 - ref_exact)))
    ref_f32 = _ref_mlp_f32(x_cat, params)   # module semantics, loose (bf16 casts)
    assert jnp.allclose(z2, ref_f32, atol=1e-1, rtol=1e-1)

    # --- case 2: larger edge set exercising the multi-tile (ragged) path ------
    n_edges2 = 300
    eli2 = jnp.stack([
        jax.random.randint(k_row2, (n_edges2,), 0, n_chem),
        jax.random.randint(k_col2, (n_edges2,), 0, n_prot),
    ])
    # Force a tiny tile so the gridded / ragged-tail path is exercised.
    z2b, x_catb, _ = edge_decoder_forward(z_dict, eli2, params,
                                          target_tile_bytes=32 * 1024)
    jax.block_until_ready(z2b)
    assert z2b.shape == (n_edges2,)
    ref_b = _ref_mlp_kernel_math(x_catb, params, jnp.bfloat16)
    assert jnp.allclose(z2b, ref_b, atol=2e-3, rtol=2e-3), \
        float(jnp.max(jnp.abs(z2b - ref_b)))

    print("KERNEL_OK")
</pallas_src>

<mosaic_0001>
module attributes {stable_mosaic.version = 11 : i64} {
  func.func @edge_decoder_kernel(%arg0: i32, %arg1: memref<128x64xf32, #tpu.memory_space<vmem>>, %arg2: memref<64x32xbf16, #tpu.memory_space<vmem>>, %arg3: memref<1x32xf32, #tpu.memory_space<vmem>>, %arg4: memref<32x32xbf16, #tpu.memory_space<vmem>>, %arg5: memref<1x32xf32, #tpu.memory_space<vmem>>, %arg6: memref<1x32xbf16, #tpu.memory_space<vmem>>, %arg7: memref<1x1xf32, #tpu.memory_space<vmem>>, %arg8: memref<1x128xf32, #tpu.memory_space<vmem>>) attributes {dimension_semantics = [#tpu.dimension_semantics<parallel>], iteration_bounds = array<i64: 1>, scalar_prefetch = 0 : i64, scratch_operands = 0 : i64, tpu.core_type = #tpu.core_type<tc>, window_params = [{transform_indices = @transform_0, window_bounds = array<i64: 128, 64>}, {pipeline_mode = #tpu.pipeline_mode<synchronous>, transform_indices = @transform_1, window_bounds = array<i64: 64, 32>}, {pipeline_mode = #tpu.pipeline_mode<synchronous>, transform_indices = @transform_2, window_bounds = array<i64: 1, 32>}, {pipeline_mode = #tpu.pipeline_mode<synchronous>, transform_indices = @transform_3, window_bounds = array<i64: 32, 32>}, {pipeline_mode = #tpu.pipeline_mode<synchronous>, transform_indices = @transform_4, window_bounds = array<i64: 1, 32>}, {pipeline_mode = #tpu.pipeline_mode<synchronous>, transform_indices = @transform_5, window_bounds = array<i64: 1, 32>}, {pipeline_mode = #tpu.pipeline_mode<synchronous>, transform_indices = @transform_6, window_bounds = array<i64: 1, 1>}, {transform_indices = @transform_7, window_bounds = array<i64: 1, 128>}]} {
    %c0 = arith.constant 0 : index
    %c0_0 = arith.constant 0 : index
    %0 = vector.load %arg2[%c0, %c0_0] : memref<64x32xbf16, #tpu.memory_space<vmem>>, vector<64x32xbf16>
    %c0_1 = arith.constant 0 : index
    %c0_2 = arith.constant 0 : index
    %1 = vector.load %arg1[%c0_1, %c0_2] : memref<128x64xf32, #tpu.memory_space<vmem>>, vector<128x64xf32>
    %2 = arith.truncf %1 : vector<128x64xf32> to vector<128x64xbf16>
    %cst = arith.constant dense<0.000000e+00> : vector<128x32xf32>
    %3 = tpu.matmul %2, %0, %cst {dimension_numbers = #tpu.dot_dimension_numbers<[1], [0], [0], [1], [0, 0, 1, 1], [], []>} : vector<128x64xbf16>, vector<64x32xbf16>, vector<128x32xf32> -> vector<128x32xf32>
    %c0_3 = arith.constant 0 : index
    %c0_4 = arith.constant 0 : index
    %4 = vector.load %arg3[%c0_3, %c0_4] : memref<1x32xf32, #tpu.memory_space<vmem>>, vector<1x32xf32>
    %5 = vector.broadcast %4 : vector<1x32xf32> to vector<128x32xf32>
    %6 = arith.addf %3, %5 : vector<128x32xf32>
    %cst_5 = arith.constant 0.000000e+00 : f32
    %7 = vector.broadcast %cst_5 : f32 to vector<128x32xf32>
    %8 = arith.maximumf %6, %7 : vector<128x32xf32>
    %c0_6 = arith.constant 0 : index
    %c0_7 = arith.constant 0 : index
    %9 = vector.load %arg4[%c0_6, %c0_7] : memref<32x32xbf16, #tpu.memory_space<vmem>>, vector<32x32xbf16>
    %10 = arith.truncf %8 : vector<128x32xf32> to vector<128x32xbf16>
    %cst_8 = arith.constant dense<0.000000e+00> : vector<128x32xf32>
    %11 = tpu.matmul %10, %9, %cst_8 {dimension_numbers = #tpu.dot_dimension_numbers<[1], [0], [0], [1], [0, 0, 1, 1], [], []>} : vector<128x32xbf16>, vector<32x32xbf16>, vector<128x32xf32> -> vector<128x32xf32>
    %c0_9 = arith.constant 0 : index
    %c0_10 = arith.constant 0 : index
    %12 = vector.load %arg5[%c0_9, %c0_10] : memref<1x32xf32, #tpu.memory_space<vmem>>, vector<1x32xf32>
    %13 = vector.broadcast %12 : vector<1x32xf32> to vector<128x32xf32>
    %14 = arith.addf %11, %13 : vector<128x32xf32>
    %cst_11 = arith.constant 0.000000e+00 : f32
    %15 = vector.broadcast %cst_11 : f32 to vector<128x32xf32>
    %16 = arith.maximumf %14, %15 : vector<128x32xf32>
    %c0_12 = arith.constant 0 : index
    %c0_13 = arith.constant 0 : index
    %17 = vector.load %arg6[%c0_12, %c0_13] : memref<1x32xbf16, #tpu.memory_space<vmem>>, vector<1x32xbf16>
    %18 = arith.truncf %16 : vector<128x32xf32> to vector<128x32xbf16>
    %cst_14 = arith.constant dense<0.000000e+00> : vector<1x128xf32>
    %19 = tpu.matmul %17, %18, %cst_14 {dimension_numbers = #tpu.dot_dimension_numbers<[1], [1], [0], [0], [0, 0, 1, 0], [], []>} : vector<1x32xbf16>, vector<128x32xbf16>, vector<1x128xf32> -> vector<1x128xf32>
    %c0_15 = arith.constant 0 : index
    %c0_16 = arith.constant 0 : index
    %20 = vector.load %arg7[%c0_15, %c0_16] : memref<1x1xf32, #tpu.memory_space<vmem>>, vector<1x1xf32>
    %21 = vector.broadcast %20 : vector<1x1xf32> to vector<1x128xf32>
    %22 = arith.addf %19, %21 : vector<1x128xf32>
    %c0_17 = arith.constant 0 : index
    %c0_18 = arith.constant 0 : index
    %23 = vector.load %arg8[%c0_17, %c0_18] : memref<1x128xf32, #tpu.memory_space<vmem>>, vector<1x128xf32>
    tpu.vector_store %arg8[%c0_17, %c0_18], %22 {strides = array<i32>} : memref<1x128xf32, #tpu.memory_space<vmem>>, vector<1x128xf32>,
    return
  }
  func.func @transform_0(%arg0: i32) -> (i32, i32) {
    %c0_i32 = arith.constant 0 : i32
    %c0_i32_0 = arith.constant 0 : i32
    return %arg0, %c0_i32 : i32, i32
  }
  func.func @transform_1(%arg0: i32) -> (i32, i32) {
    %c0_i32 = arith.constant 0 : i32
    %c0_i32_0 = arith.constant 0 : i32
    %c0_i32_1 = arith.constant 0 : i32
    return %c0_i32, %c0_i32_0 : i32, i32
  }
  func.func @transform_2(%arg0: i32) -> (i32, i32) {
    %c0_i32 = arith.constant 0 : i32
    %c0_i32_0 = arith.constant 0 : i32
    %c0_i32_1 = arith.constant 0 : i32
    return %c0_i32, %c0_i32_0 : i32, i32
  }
  func.func @transform_3(%arg0: i32) -> (i32, i32) {
    %c0_i32 = arith.constant 0 : i32
    %c0_i32_0 = arith.constant 0 : i32
    %c0_i32_1 = arith.constant 0 : i32
    return %c0_i32, %c0_i32_0 : i32, i32
  }
  func.func @transform_4(%arg0: i32) -> (i32, i32) {
    %c0_i32 = arith.constant 0 : i32
    %c0_i32_0 = arith.constant 0 : i32
    %c0_i32_1 = arith.constant 0 : i32
    return %c0_i32, %c0_i32_0 : i32, i32
  }
  func.func @transform_5(%arg0: i32) -> (i32, i32) {
    %c0_i32 = arith.constant 0 : i32
    %c0_i32_0 = arith.constant 0 : i32
    %c0_i32_1 = arith.constant 0 : i32
    return %c0_i32, %c0_i32_0 : i32, i32
  }
  func.func @transform_6(%arg0: i32) -> (i32, i32) {
    %c0_i32 = arith.constant 0 : i32
    %c0_i32_0 = arith.constant 0 : i32
    %c0_i32_1 = arith.constant 0 : i32
    return %c0_i32, %c0_i32_0 : i32, i32
  }
  func.func @transform_7(%arg0: i32) -> (i32, i32) {
    %c0_i32 = arith.constant 0 : i32
    %c0_i32_0 = arith.constant 0 : i32
    return %c0_i32, %arg0 : i32, i32
  }
}

</mosaic_0001>

<llo_original>
// kernel: tpu_custom_call.1
$region0: #{tpu_custom_call.1}
  #allocation0 [shape = 'u32[]', space=smem, size = 0x4, offset = 0x4, fixed_abs, tag = 'smem constant byte address 0x4 - core index']
  #allocation1 [shape = 'u32[72,128]{1,0:T(1,128)}', space=vmem, size = 0x9000, scoped, tag = 'internal scratch']
  #allocation2 [shape = 'f32[1,1]{1,0:T(1,128)S(1)}', space=vmem, size = 0x200, scoped, tag = 'scoped memory for tpu_custom_call.1']
  %s0 = inlined_call_operand.vmem [shape: f32[16,64], index: 0, kind: input, shape index: {}]
  %s1 = inlined_call_operand.vmem [shape: bf16[64,32], index: 1, kind: input, shape index: {}]
  %s2 = inlined_call_operand.vmem [shape: f32[1,32], index: 2, kind: input, shape index: {}]
  %s3 = inlined_call_operand.vmem [shape: bf16[32,32], index: 3, kind: input, shape index: {}]
  %s4 = inlined_call_operand.vmem [shape: f32[1,32], index: 4, kind: input, shape index: {}]
  %s5 = inlined_call_operand.vmem [shape: bf16[1,32], index: 5, kind: input, shape index: {}]
  %s6 = inlined_call_operand.<no memory space> [shape: f32[1,1], index: 6, kind: input, shape index: {}]
  %s7 = inlined_call_operand.hbm [shape: f32[1,16], index: 7, kind: output, shape index: {}]
  %s8 = sld [smem:[#allocation0]]
  $region38: #{tpu_custom_call.1} parent=0
    _
  %s10 = ssub.s32 1, %s8
  %s11 = scalar_select 0, %s10, %s8
  %v12 = vstv %s6
  %13 = vst [vmem:[#allocation2] sm:$0x1] %v12
  $region1: #{tpu_custom_call.1} parent=0
    #allocation3 [shape = 'u8[512]{0}', space=vmem, size = 0x400, scoped, tag = 'output window, operand 0, single buffered']
    #allocation4 [shape = 's32[1]{0}', space=sflag, size = 0x4, scoped, tag = 'scoped memory for tpu_custom_call.1']
    %14 = vsyncpa [#allocation4], 0
    // Predicated region
    $region2: #{tpu_custom_call.1} parent=1 // pred_check
      _
    $region3: #{tpu_custom_call.1} parent=1 // pred_check_branch
      %16 = sbr.rel (0) target = $region5
    $region4: #{tpu_custom_call.1} parent=1 // pred_region
      _
    $region5: #{tpu_custom_call.1} parent=1 // pred_fallthru
      _
    // Predicated region
    $region6: #{tpu_custom_call.1} parent=1 // pred_check
      _
    $region7: #{tpu_custom_call.1} parent=1 // pred_check_branch
      %18 = sbr.rel (0) target = $region9
    $region8: #{tpu_custom_call.1} parent=1 // pred_region
      _
    $region9: #{tpu_custom_call.1} parent=1 // pred_fallthru
      _
    // Predicated region
    $region10: #{tpu_custom_call.1} parent=1 // pred_check
      _
    $region11: #{tpu_custom_call.1} parent=1 // pred_check_branch
      %20 = sbr.rel (0) target = $region13
    $region12: #{tpu_custom_call.1} parent=1 // pred_region
      _
    $region13: #{tpu_custom_call.1} parent=1 // pred_fallthru
      _
    // Predicated region
    $region14: #{tpu_custom_call.1} parent=1 // pred_check
      _
    $region15: #{tpu_custom_call.1} parent=1 // pred_check_branch
      %22 = sbr.rel (0) target = $region17
    $region16: #{tpu_custom_call.1} parent=1 // pred_region
      _
    $region17: #{tpu_custom_call.1} parent=1 // pred_fallthru
      _
    // Predicated region
    $region18: #{tpu_custom_call.1} parent=1 // pred_check
      _
    $region19: #{tpu_custom_call.1} parent=1 // pred_check_branch
      %24 = sbr.rel (0) target = $region21
    $region20: #{tpu_custom_call.1} parent=1 // pred_region
      _
    $region21: #{tpu_custom_call.1} parent=1 // pred_fallthru
      _
    // Predicated region
    $region22: #{tpu_custom_call.1} parent=1 // pred_check
      _
    $region23: #{tpu_custom_call.1} parent=1 // pred_check_branch
      %26 = sbr.rel (0) target = $region25
    $region24: #{tpu_custom_call.1} parent=1 // pred_region
      _
    $region25: #{tpu_custom_call.1} parent=1 // pred_fallthru
      _
    // Predicated region
    $region26: #{tpu_custom_call.1} parent=1 // pred_check
      _
    $region27: #{tpu_custom_call.1} parent=1 // pred_check_branch
      %28 = sbr.rel (0) target = $region29
    $region28: #{tpu_custom_call.1} parent=1 // pred_region
      _
    $region29: #{tpu_custom_call.1} parent=1 // pred_fallthru
      _
    %v30 = vld [vmem:[%s1] sm:$0xf]
    %v31 = vld [vmem:[%s1 + $0x4] sm:$0xf]
    %v32 = vld [vmem:[%s1 + $0x8] sm:$0xf]
    %v33 = vld [vmem:[%s1 + $0xc] sm:$0xf]
    %v34 = vld [vmem:[%s1 + $0x10] sm:$0xf]
    %v35 = vld [vmem:[%s1 + $0x14] sm:$0xf]
    %v36 = vld [vmem:[%s1 + $0x18] sm:$0xf]
    %v37 = vld [vmem:[%s1 + $0x1c] sm:$0xf]
    %v38 = vld [vmem:[%s0] sm:$0xff]
    %v39 = vld [vmem:[%s0 + $0x8] sm:$0xff]
    %v40 = vld [vmem:[%s0 + $0x10] sm:$0xff]
    %v41 = vld [vmem:[%s0 + $0x18] sm:$0xff]
    %v42 = vld [vmem:[%s0 + $0x20] sm:$0xff]
    %v43 = vld [vmem:[%s0 + $0x28] sm:$0xff]
    %v44 = vld [vmem:[%s0 + $0x30] sm:$0xff]
    %v45 = vld [vmem:[%s0 + $0x38] sm:$0xff]
    %v46 = vld [vmem:[%s0 + $0x40] sm:$0xff]
    %v47 = vld [vmem:[%s0 + $0x48] sm:$0xff]
    %v48 = vld [vmem:[%s0 + $0x50] sm:$0xff]
    %v49 = vld [vmem:[%s0 + $0x58] sm:$0xff]
    %v50 = vld [vmem:[%s0 + $0x60] sm:$0xff]
    %v51 = vld [vmem:[%s0 + $0x68] sm:$0xff]
    %v52 = vld [vmem:[%s0 + $0x70] sm:$0xff]
    %v53 = vld [vmem:[%s0 + $0x78] sm:$0xff]
    %v54 = vpack.c.bf16 %v39, %v38
    %v55 = vpack.c.bf16 %v41, %v40
    %v56 = vpack.c.bf16 %v43, %v42
    %v57 = vpack.c.bf16 %v45, %v44
    %v58 = vpack.c.bf16 %v47, %v46
    %v59 = vpack.c.bf16 %v49, %v48
    %v60 = vpack.c.bf16 %v51, %v50
    %v61 = vpack.c.bf16 %v53, %v52
    %v62 = vld [vmem:[%s2] sm:$0x1]
    %v64 = vperm.slane %v62, 0
    %v74 = vunpack.c.l.b16 %v30
    %v75 = vunpack.c.l.b16 %v31
    %v76 = vunpack.c.l.b16 %v32
    %v77 = vunpack.c.l.b16 %v33
    %v78 = vunpack.c.l.b16 %v34
    %v79 = vunpack.c.l.b16 %v35
    %v80 = vunpack.c.l.b16 %v36
    %v81 = vunpack.c.l.b16 %v37
    %v82 = vpack.c.b16 %v75, %v74
    %v83 = vpack.c.b16 %v77, %v76
    %v84 = vpack.c.b16 %v79, %v78
    %v85 = vpack.c.b16 %v81, %v80
    %vm90 = vcmask 523264
    %v92 = vsel %vm90, %v54, 0
    %v95 = vsel %vm90, %v55, 0
    %v98 = vsel %vm90, %v56, 0
    %v101 = vsel %vm90, %v57, 0
    %v104 = vsel %vm90, %v58, 0
    %v107 = vsel %vm90, %v59, 0
    %v110 = vsel %vm90, %v60, 0
    %v113 = vsel %vm90, %v61, 0
    %115 = vmatpush.bf16.msra.mxu0 0
    %116 = vmatpush.bf16.msra.mxu0 0
    %117 = vmatpush.bf16.msra.mxu0 0
    %118 = vmatpush.bf16.msra.mxu0 0
    %119 = vmatpush.bf16.msra.mxu0 %v85
    %120 = vmatpush.bf16.msra.mxu0 %v84
    %121 = vmatpush.bf16.msra.mxu0 %v83
    %122 = vmatpush.bf16.msra.mxu0 %v82
    %123 = vmatmul.bf16.gmra.mxu0 %v92
    %v124 = vpop.f32.mrf.mxu0
    %v125 = vadd.f32 %v64, %v124
    %v126 = vpop.f32.mrf.mxu0
    %v127 = vadd.f32 %v64, %v126
    %128 = vmatmul.bf16.gmra.mxu0 %v95
    %v129 = vpop.f32.mrf.mxu0
    %v130 = vadd.f32 %v64, %v129
    %v131 = vpop.f32.mrf.mxu0
    %v132 = vadd.f32 %v64, %v131
    %133 = vmatmul.bf16.gmra.mxu0 %v98
    %v134 = vpop.f32.mrf.mxu0
    %v135 = vadd.f32 %v64, %v134
    %v136 = vpop.f32.mrf.mxu0
    %v137 = vadd.f32 %v64, %v136
    %138 = vmatmul.bf16.gmra.mxu0 %v101
    %v139 = vpop.f32.mrf.mxu0
    %v140 = vadd.f32 %v64, %v139
    %v141 = vpop.f32.mrf.mxu0
    %v142 = vadd.f32 %v64, %v141
    %143 = vmatmul.bf16.gmra.mxu0 %v104
    %v144 = vpop.f32.mrf.mxu0
    %v145 = vadd.f32 %v64, %v144
    %v146 = vpop.f32.mrf.mxu0
    %v147 = vadd.f32 %v64, %v146
    %148 = vmatmul.bf16.gmra.mxu0 %v107
    %v149 = vpop.f32.mrf.mxu0
    %v150 = vadd.f32 %v64, %v149
    %v151 = vpop.f32.mrf.mxu0
    %v152 = vadd.f32 %v64, %v151
    %153 = vmatmul.bf16.gmra.mxu0 %v110
    %v154 = vpop.f32.mrf.mxu0
    %v155 = vadd.f32 %v64, %v154
    %v156 = vpop.f32.mrf.mxu0
    %v157 = vadd.f32 %v64, %v156
    %158 = vmatmul.bf16.gmra.mxu0 %v113
    %v159 = vpop.f32.mrf.mxu0
    %v160 = vadd.f32 %v64, %v159
    %v161 = vpop.f32.mrf.mxu0
    %v162 = vadd.f32 %v64, %v161
    %163 = vdwg.mxu0
    %v164 = vmax.f32 %v125, 0.0
    %v165 = vmax.f32 %v127, 0.0
    %v166 = vmax.f32 %v130, 0.0
    %v167 = vmax.f32 %v132, 0.0
    %v168 = vmax.f32 %v135, 0.0
    %v169 = vmax.f32 %v137, 0.0
    %v170 = vmax.f32 %v140, 0.0
    %v171 = vmax.f32 %v142, 0.0
    %v172 = vmax.f32 %v145, 0.0
    %v173 = vmax.f32 %v147, 0.0
    %v174 = vmax.f32 %v150, 0.0
    %v175 = vmax.f32 %v152, 0.0
    %v176 = vmax.f32 %v155, 0.0
    %v177 = vmax.f32 %v157, 0.0
    %v178 = vmax.f32 %v160, 0.0
    %v179 = vmax.f32 %v162, 0.0
    %v180 = vld [vmem:[%s3] sm:$0xf]
    %v181 = vld [vmem:[%s3 + $0x4] sm:$0xf]
    %v182 = vld [vmem:[%s3 + $0x8] sm:$0xf]
    %v183 = vld [vmem:[%s3 + $0xc] sm:$0xf]
    %v184 = vpack.c.bf16 %v165, %v164
    %v185 = vpack.c.bf16 %v167, %v166
    %v186 = vpack.c.bf16 %v169, %v168
    %v187 = vpack.c.bf16 %v171, %v170
    %v188 = vpack.c.bf16 %v173, %v172
    %v189 = vpack.c.bf16 %v175, %v174
    %v190 = vpack.c.bf16 %v177, %v176
    %v191 = vpack.c.bf16 %v179, %v178
    %v192 = vld [vmem:[%s4] sm:$0x1]
    %v194 = vperm.slane %v192, 0
    %v200 = vunpack.c.l.b16 %v180
    %v201 = vunpack.c.l.b16 %v181
    %v202 = vunpack.c.l.b16 %v182
    %v203 = vunpack.c.l.b16 %v183
    %v204 = vpack.c.b16 %v201, %v200
    %v205 = vpack.c.b16 %v203, %v202
    %vm208 = vcmask 261120
    %v210 = vsel %vm208, %v184, 0
    %v213 = vsel %vm208, %v185, 0
    %v216 = vsel %vm208, %v186, 0
    %v219 = vsel %vm208, %v187, 0
    %v222 = vsel %vm208, %v188, 0
    %v225 = vsel %vm208, %v189, 0
    %v228 = vsel %vm208, %v190, 0
    %v231 = vsel %vm208, %v191, 0
    %233 = vmatpush.bf16.msra.mxu0 0
    %234 = vmatpush.bf16.msra.mxu0 0
    %235 = vmatpush.bf16.msra.mxu0 0
    %236 = vmatpush.bf16.msra.mxu0 0
    %237 = vmatpush.bf16.msra.mxu0 0
    %238 = vmatpush.bf16.msra.mxu0 0
    %239 = vmatpush.bf16.msra.mxu0 %v205
    %240 = vmatpush.bf16.msra.mxu0 %v204
    %241 = vmatmul.bf16.gmra.mxu0 %v210
    %v242 = vpop.f32.mrf.mxu0
    %v243 = vadd.f32 %v194, %v242
    %v244 = vpop.f32.mrf.mxu0
    %v245 = vadd.f32 %v194, %v244
    %246 = vmatmul.bf16.gmra.mxu0 %v213
    %v247 = vpop.f32.mrf.mxu0
    %v248 = vadd.f32 %v194, %v247
    %v249 = vpop.f32.mrf.mxu0
    %v250 = vadd.f32 %v194, %v249
    %251 = vmatmul.bf16.gmra.mxu0 %v216
    %v252 = vpop.f32.mrf.mxu0
    %v253 = vadd.f32 %v194, %v252
    %v254 = vpop.f32.mrf.mxu0
    %v255 = vadd.f32 %v194, %v254
    %256 = vmatmul.bf16.gmra.mxu0 %v219
    %v257 = vpop.f32.mrf.mxu0
    %v258 = vadd.f32 %v194, %v257
    %v259 = vpop.f32.mrf.mxu0
    %v260 = vadd.f32 %v194, %v259
    %261 = vmatmul.bf16.gmra.mxu0 %v222
    %v262 = vpop.f32.mrf.mxu0
    %v263 = vadd.f32 %v194, %v262
    %v264 = vpop.f32.mrf.mxu0
    %v265 = vadd.f32 %v194, %v264
    %266 = vmatmul.bf16.gmra.mxu0 %v225
    %v267 = vpop.f32.mrf.mxu0
    %v268 = vadd.f32 %v194, %v267
    %v269 = vpop.f32.mrf.mxu0
    %v270 = vadd.f32 %v194, %v269
    %271 = vmatmul.bf16.gmra.mxu0 %v228
    %v272 = vpop.f32.mrf.mxu0
    %v273 = vadd.f32 %v194, %v272
    %v274 = vpop.f32.mrf.mxu0
    %v275 = vadd.f32 %v194, %v274
    %276 = vmatmul.bf16.gmra.mxu0 %v231
    %v277 = vpop.f32.mrf.mxu0
    %v278 = vadd.f32 %v194, %v277
    %v279 = vpop.f32.mrf.mxu0
    %v280 = vadd.f32 %v194, %v279
    %281 = vdwg.mxu0
    %v282 = vmax.f32 %v243, 0.0
    %v283 = vmax.f32 %v245, 0.0
    %v284 = vmax.f32 %v248, 0.0
    %v285 = vmax.f32 %v250, 0.0
    %v286 = vmax.f32 %v253, 0.0
    %v287 = vmax.f32 %v255, 0.0
    %v288 = vmax.f32 %v258, 0.0
    %v289 = vmax.f32 %v260, 0.0
    %v290 = vmax.f32 %v263, 0.0
    %v291 = vmax.f32 %v265, 0.0
    %v292 = vmax.f32 %v268, 0.0
    %v293 = vmax.f32 %v270, 0.0
    %v294 = vmax.f32 %v273, 0.0
    %v295 = vmax.f32 %v275, 0.0
    %v296 = vmax.f32 %v278, 0.0
    %v297 = vmax.f32 %v280, 0.0
    %v298 = vld [vmem:[%s5] sm:$0x1]
    %v299 = vpack.c.bf16 %v283, %v282
    %v300 = vpack.c.bf16 %v285, %v284
    %v301 = vpack.c.bf16 %v287, %v286
    %v302 = vpack.c.bf16 %v289, %v288
    %v303 = vpack.c.bf16 %v291, %v290
    %v304 = vpack.c.bf16 %v293, %v292
    %v305 = vpack.c.bf16 %v295, %v294
    %v306 = vpack.c.bf16 %v297, %v296
    %v307 = vld [vmem:[#allocation2] sm:$0x1]
    %309 = vset.pattern.permute.xlu0 0
    %310 = vperm.xlu0 %309, %v307
    %v311 = vpop.permute.xlu0 %310
    %v313 = vperm.slane %v311, 0
    %v315 = vsel %vm208, %v298, 0
    %v318 = vsel %vm208, %v299, 0
    %v321 = vsel %vm208, %v300, 0
    %v324 = vsel %vm208, %v301, 0
    %v327 = vsel %vm208, %v302, 0
    %v330 = vsel %vm208, %v303, 0
    %v333 = vsel %vm208, %v304, 0
    %v336 = vsel %vm208, %v305, 0
    %v339 = vsel %vm208, %v306, 0
    %341 = vmatpush.bf16.xpose.msra.mxu0 %v339
    %342 = vmatpush.bf16.xpose.msra.mxu0 %v336
    %343 = vmatpush.bf16.xpose.msra.mxu0 %v333
    %344 = vmatpush.bf16.xpose.msra.mxu0 %v330
    %345 = vmatpush.bf16.xpose.msra.mxu0 %v327
    %346 = vmatpush.bf16.xpose.msra.mxu0 %v324
    %347 = vmatpush.bf16.xpose.msra.mxu0 %v321
    %348 = vmatpush.bf16.xpose.msra.mxu0 %v318
    %349 = vmatmul.bf16.gmra.mxu0 %v315
    %v350 = vpop.f32.mrf.mxu0
    %v351 = vadd.f32 %v313, %v350
    %v352 = vpop.f32.mrf.mxu0
    %353 = vdwg.mxu0
    %354 = vst [vmem:[#allocation3] sm:$0x1] %v351
    // Predicated region
    $region30: #{tpu_custom_call.1} parent=1 // pred_check
      _
    $region31: #{tpu_custom_call.1} parent=1 // pred_check_branch
      %356 = sbr.rel (0) target = $region33
    $region32: #{tpu_custom_call.1} parent=1 // pred_region
      %358 = vsyncadd [#allocation4], 0
      %s360 = sshll.u32 [#allocation3], 4
      %s361 = int_to_ptr.vmem [resolvable:$true] %s360
      %s362 = sshll.u32 %s7, 4
      %s363 = int_to_ptr.hbm [resolvable:$true] %s362
      %365 = dma.vmem_to_hbm [thread:$0]  %s361, 16, %s363, [#allocation4]
    $region33: #{tpu_custom_call.1} parent=1 // pred_fallthru
      _
    // Predicated region
    $region34: #{tpu_custom_call.1} parent=1 // pred_check
      _
    $region35: #{tpu_custom_call.1} parent=1 // pred_check_branch
      %367 = sbr.rel (0) target = $region37
    $region36: #{tpu_custom_call.1} parent=1 // pred_region
      %369 = dma.done [#allocation4], 16
    $region37: #{tpu_custom_call.1} parent=1 // pred_fallthru
      _
    %370 = vsyncpa [#allocation4], 1

</llo_original>
